<compile_context>
chip_gen: v5e
topology: v5e:2x2
jax: 0.10.0
libtpu: 0.0.40
codegen_flags: <defaults>
</compile_context>

<pallas_src>
import functools

import jax
import jax.numpy as jnp
from jax.experimental import pallas as pl
from jax.experimental.pallas import tpu as pltpu

EPS = 1e-5
SLOPE = 0.2
M_TILE_TARGET = 256   # lane tile; raise to 512-2048 at realistic sizes (VMEM budget)


# ---------------------------------------------------------------------------
# Pallas kernels
# ---------------------------------------------------------------------------
def _conv_bn_lrelu_kernel(w_ref, p_ref, g_ref, b_ref, o_ref, sum_ref, sq_ref,
                          *, lrelu_first, inv_m):
    """Fused conv (transposed im2col matmul) + BatchNorm(train) + LeakyReLU.

    grid = (2, n_m): axis 0 = phase (0: accumulate BN partials, 1: normalize),
    axis 1 = M tile.  w_ref (C,K) bf16, p_ref (K,mt) bf16, g/b (C,1) f32,
    o_ref (C,mt), sum_ref/sq_ref (C,1) f32 VMEM scratch (persist across grid).
    """
    phase = pl.program_id(0)
    j = pl.program_id(1)

    # conv tile on the MXU: bf16 operands, f32 accumulation.
    y = jnp.dot(w_ref[...], p_ref[...], preferred_element_type=jnp.float32)
    if lrelu_first:                      # layer 1: Conv -> LeakyReLU -> BN
        y = jnp.maximum(y, SLOPE * y)    # LeakyReLU(0.2) as vmul+vmax

    @pl.when((phase == 0) & (j == 0))
    def _():
        sum_ref[...] = jnp.zeros_like(sum_ref)
        sq_ref[...] = jnp.zeros_like(sq_ref)

    @pl.when(phase == 0)
    def _():
        # single-pass BN partials: per-channel sum / sum-of-squares (lane reduce)
        sum_ref[...] += jnp.sum(y, axis=1, keepdims=True)
        sq_ref[...] += jnp.sum(y * y, axis=1, keepdims=True)
        o_ref[...] = y.astype(o_ref.dtype)       # provisional; overwritten in phase 1

    @pl.when(phase == 1)
    def _():
        mean = sum_ref[...] * inv_m
        var = sq_ref[...] * inv_m - mean * mean          # biased variance, f32
        scale = g_ref[...] * jax.lax.rsqrt(var + EPS)    # fold BN -> one FMA/elem
        bias = b_ref[...] - mean * scale
        z = y * scale + bias
        if not lrelu_first:               # layers 2..: Conv -> BN -> LeakyReLU
            z = jnp.maximum(z, SLOPE * z)
        o_ref[...] = z.astype(o_ref.dtype)


def _tail_kernel(p4_ref, w4_ref, g4_ref, b4_ref, w5_ref, g5_ref, b5_ref,
                 wfc_ref, bfc_ref, o_ref, *, n_batch):
    """Fused tail: conv layer 4 + conv layer 5 + Linear(dim_h,1) + Sigmoid.

    p4_ref (K4, 4N) bf16 patches with columns ordered (oh, ow, n);
    w4_ref (C4, K4) bf16; w5_ref (4, C5, C4) bf16 centre-2x2 taps of layer 5;
    g/b (C,1) f32; wfc (C5,1), bfc (1,1) f32; o_ref (1, N) f32.
    """
    # ---- layer 4: conv -> BN(train over 4N cols) -> LeakyReLU ----------------
    y4 = jnp.dot(w4_ref[...], p4_ref[...], preferred_element_type=jnp.float32)  # (C4, 4N)
    inv4 = 1.0 / y4.shape[1]
    m4 = jnp.sum(y4, axis=1, keepdims=True) * inv4
    v4 = jnp.sum(y4 * y4, axis=1, keepdims=True) * inv4 - m4 * m4
    sc4 = g4_ref[...] * jax.lax.rsqrt(v4 + EPS)
    a4 = y4 * sc4 + (b4_ref[...] - m4 * sc4)
    a4 = jnp.maximum(a4, SLOPE * a4).astype(jnp.bfloat16)

    # ---- layer 5: 1x1-spatial output == sum of centre-2x2 taps over the 2x2 map
    c5 = w5_ref.shape[1]
    y5 = jnp.zeros((c5, n_batch), jnp.float32)
    for p in range(4):            # accumulate the four spatial positions (MXU)
        y5 = y5 + jnp.dot(w5_ref[p], a4[:, p * n_batch:(p + 1) * n_batch],
                          preferred_element_type=jnp.float32)
    inv5 = 1.0 / n_batch
    m5 = jnp.sum(y5, axis=1, keepdims=True) * inv5
    v5 = jnp.sum(y5 * y5, axis=1, keepdims=True) * inv5 - m5 * m5
    sc5 = g5_ref[...] * jax.lax.rsqrt(v5 + EPS)
    a5 = y5 * sc5 + (b5_ref[...] - m5 * sc5)
    a5 = jnp.maximum(a5, SLOPE * a5)

    # ---- Linear(dim_h,1) + Sigmoid: VPU mul + sublane reduce, EUP exp/recip --
    logits = jnp.sum(a5 * wfc_ref[...], axis=0, keepdims=True) + bfc_ref[...]   # (1, N)
    o_ref[...] = pl.reciprocal(1.0 + jnp.exp(-logits), approx=True)


# ---------------------------------------------------------------------------
# pallas_call wrappers
# ---------------------------------------------------------------------------
def _pick_m_tile(m):
    if m <= M_TILE_TARGET:
        return m
    t = M_TILE_TARGET
    while m % t:
        t //= 2
    return max(t, 1)


def _vmem_limit_bytes(c, k, mt, out_bytes):
    # double-buffered input/output blocks + weights + BN scratch, with headroom
    est = (2 * (k * mt * 2) + 2 * (c * k * 2) + 2 * (c * mt * out_bytes)
           + 2 * (c * 1 * 4) + 4 * (c * 1 * 4))
    return int(min(max(3 * est + (1 << 20), 16 << 20), 48 << 20))


def conv_bn_lrelu(w2d, patches, gamma, beta, *, lrelu_first):
    C, K = w2d.shape
    M = patches.shape[1]
    mt = _pick_m_tile(M)
    n_m = M // mt
    # bf16 packs (16,128) per vreg -> keep f32 storage for narrow-channel layers
    out_dtype = jnp.bfloat16 if C >= 16 else jnp.float32
    kern = functools.partial(_conv_bn_lrelu_kernel,
                             lrelu_first=lrelu_first, inv_m=1.0 / M)
    return pl.pallas_call(
        kern,
        out_shape=jax.ShapeDtypeStruct((C, M), out_dtype),
        grid=(2, n_m),                       # (phase, M tiles)
        in_specs=[
            pl.BlockSpec((C, K), lambda ph, j: (0, 0)),
            pl.BlockSpec((K, mt), lambda ph, j: (0, j)),
            pl.BlockSpec((C, 1), lambda ph, j: (0, 0)),
            pl.BlockSpec((C, 1), lambda ph, j: (0, 0)),
        ],
        out_specs=pl.BlockSpec((C, mt), lambda ph, j: (0, j)),
        scratch_shapes=[pltpu.VMEM((C, 1), jnp.float32),    # sum
                        pltpu.VMEM((C, 1), jnp.float32)],   # sum of squares
        compiler_params=pltpu.CompilerParams(
            dimension_semantics=("arbitrary", "arbitrary"),
            vmem_limit_bytes=_vmem_limit_bytes(
                C, K, mt, jnp.dtype(out_dtype).itemsize),
        ),
    )(w2d, patches, gamma.reshape(C, 1), beta.reshape(C, 1))


def tail_fused(p4, w4_2d, g4, b4, w5c, g5, b5, fc_w, fc_b, n_batch):
    K4, M4 = p4.shape
    C4 = w4_2d.shape[0]
    C5 = w5c.shape[1]
    kern = functools.partial(_tail_kernel, n_batch=n_batch)
    return pl.pallas_call(
        kern,
        out_shape=jax.ShapeDtypeStruct((1, n_batch), jnp.float32),
        grid=(1,),
        in_specs=[
            pl.BlockSpec((K4, M4), lambda i: (0, 0)),
            pl.BlockSpec((C4, K4), lambda i: (0, 0)),
            pl.BlockSpec((C4, 1), lambda i: (0, 0)),
            pl.BlockSpec((C4, 1), lambda i: (0, 0)),
            pl.BlockSpec((4, C5, C4), lambda i: (0, 0, 0)),
            pl.BlockSpec((C5, 1), lambda i: (0, 0)),
            pl.BlockSpec((C5, 1), lambda i: (0, 0)),
            pl.BlockSpec((C5, 1), lambda i: (0, 0)),
            pl.BlockSpec((1, 1), lambda i: (0, 0)),
        ],
        out_specs=pl.BlockSpec((1, n_batch), lambda i: (0, 0)),
        compiler_params=pltpu.CompilerParams(
            dimension_semantics=("arbitrary",),
            vmem_limit_bytes=16 << 20),
    )(p4, w4_2d, g4.reshape(C4, 1), b4.reshape(C4, 1), w5c,
      g5.reshape(C5, 1), b5.reshape(C5, 1),
      fc_w.reshape(C5, 1), fc_b.reshape(1, 1))


# ---------------------------------------------------------------------------
# Host-side glue: im2col for k=4, stride=2, pad=1 on channel-major activations.
# TODO(synk): move this gather in-kernel (per-tap accumulated matmuls from the
#             un-inflated activation) to remove the ~4x patch-matrix HBM traffic.
# ---------------------------------------------------------------------------
def im2col_cfirst(x, k=4, s=2, p=1):
    """(C,N,H,W) -> (C*k*k, N*Ho*Wo); rows (c,kh,kw), columns (n,ho,wo)."""
    C, N, H, W = x.shape
    xp = jnp.pad(x, ((0, 0), (0, 0), (p, p), (p, p)))
    Ho = (H + 2 * p - k) // s + 1
    Wo = (W + 2 * p - k) // s + 1
    taps = [xp[:, :, kh: kh + s * Ho: s, kw: kw + s * Wo: s]
            for kh in range(k) for kw in range(k)]            # each (C, N, Ho, Wo)
    return jnp.stack(taps, axis=1).reshape(C * k * k, N * Ho * Wo), Ho, Wo


def im2col_tail(x, k=4, s=2, p=1):
    """im2col for the fused tail (layer-4 input, 4x4 spatial): columns ordered
    (oh, ow, n) so each layer-4 output position is a contiguous N-column block."""
    C, N, H, W = x.shape
    xp = jnp.pad(x, ((0, 0), (0, 0), (p, p), (p, p)))
    Ho = (H + 2 * p - k) // s + 1
    Wo = (W + 2 * p - k) // s + 1
    taps = [xp[:, :, kh: kh + s * Ho: s, kw: kw + s * Wo: s]
            for kh in range(k) for kw in range(k)]            # each (C, N, Ho, Wo)
    t = jnp.stack(taps, axis=1)                               # (C, 16, N, Ho, Wo)
    t = jnp.transpose(t, (0, 1, 3, 4, 2))                     # (C, 16, Ho, Wo, N)
    return t.reshape(C * k * k, Ho * Wo * N)


# ---------------------------------------------------------------------------
# Full forward (Pallas path)
# ---------------------------------------------------------------------------
def gan_discriminator_forward(x_nchw, convs, fc_w, fc_b):
    N = x_nchw.shape[0]
    # single boundary transpose NCHW -> (C, N, H, W); bf16 MXU operands from here
    x = jnp.transpose(x_nchw, (1, 0, 2, 3)).astype(jnp.bfloat16)

    # layers 1-3: tiled conv+BN+LeakyReLU pallas kernels (M = N*Ho*Wo on lanes)
    for i, (w, g, b) in enumerate(convs[:3]):
        patches, Ho, Wo = im2col_cfirst(x)
        patches = patches.astype(jnp.bfloat16)
        w2d = w.reshape(w.shape[0], -1).astype(jnp.bfloat16)      # (C_out, C_in*16)
        y = conv_bn_lrelu(w2d, patches, g, b, lrelu_first=(i == 0))   # (C_out, M)
        x = y.reshape(w.shape[0], N, Ho, Wo)

    # fused tail: layer 4 + layer 5 + Linear + Sigmoid (lane width < 128 -> stay in VMEM)
    w4, g4, b4 = convs[3]
    w5, g5, b5 = convs[4]
    p4 = im2col_tail(x).astype(jnp.bfloat16)                      # (C3*16, 4*N)
    w4_2d = w4.reshape(w4.shape[0], -1).astype(jnp.bfloat16)
    # layer 5 output is 1x1 spatial: only its centre 2x2 taps hit non-pad data
    w5c = jnp.stack([w5[:, :, 1 + p_ // 2, 1 + p_ % 2] for p_ in range(4)],
                    axis=0).astype(jnp.bfloat16)                  # (4, C5, C4)
    out = tail_fused(p4, w4_2d, g4, b4, w5c, g5, b5, fc_w, fc_b, N)   # (1, N)
    return out.reshape(N, 1)


# ---------------------------------------------------------------------------
# Pure-JAX reference with matching numerics (bf16 matmul operands, f32
# accumulation, f32 BN/LeakyReLU, bf16 inter-layer values) for the check.
# ---------------------------------------------------------------------------
def ref_forward(x, convs, fc_w, fc_b):
    act = x.astype(jnp.bfloat16)
    n_layers = len(convs)
    for i, (w, g, b) in enumerate(convs):
        y = jax.lax.conv_general_dilated(
            act, w.astype(jnp.bfloat16), (2, 2), ((1, 1), (1, 1)),
            dimension_numbers=("NCHW", "OIHW", "NCHW"),
            preferred_element_type=jnp.float32)

        def bn(v, g=g, b=b):
            m = v.mean(axis=(0, 2, 3), keepdims=True)
            var = jnp.square(v - m).mean(axis=(0, 2, 3), keepdims=True)
            scale = g.reshape(1, -1, 1, 1) * jax.lax.rsqrt(var + EPS)
            bias = b.reshape(1, -1, 1, 1) - m * scale
            return v * scale + bias

        def lrelu(v):
            return jnp.where(v >= 0, v, SLOPE * v)

        y = bn(lrelu(y)) if i == 0 else lrelu(bn(y))
        act = y.astype(jnp.bfloat16) if i < n_layers - 1 else y

    feat = act.reshape(act.shape[0], -1)            # (N, dim_h), f32
    logits = feat @ fc_w.T + fc_b
    return 1.0 / (1.0 + jnp.exp(-logits))


# ---------------------------------------------------------------------------
if __name__ == "__main__":
    key = jax.random.PRNGKey(0)

    # args: n_channel=4, dim_h=8 (small but architecture-consistent); spatial must
    # be 32 so the five stride-2 convs reach 1x1 (CIFAR geometry).  Batch 8 keeps
    # every conv layer's lane axis (N*Ho*Wo) >= 128 per the perf review.
    N, n_channel, dim_h = 8, 4, 8
    H = W = 32

    chan_pairs = [
        (n_channel, dim_h),
        (dim_h, dim_h * 4),
        (dim_h * 4, dim_h * 8),
        (dim_h * 8, dim_h * 2),
        (dim_h * 2, dim_h),
    ]

    convs = []
    for i, (ci, co) in enumerate(chan_pairs):
        kw = jax.random.fold_in(key, i)
        w = jax.random.normal(kw, (co, ci, 4, 4), dtype=jnp.float32) * 0.05
        gamma = jnp.ones((co,), jnp.float32)
        beta = jnp.zeros((co,), jnp.float32)
        convs.append((w, gamma, beta))

    fc_w = jax.random.normal(jax.random.fold_in(key, 100), (1, dim_h), jnp.float32) * 0.1
    fc_b = jnp.zeros((1,), jnp.float32)

    x = jax.random.normal(jax.random.fold_in(key, 200), (N, n_channel, H, W), jnp.float32)

    out = jax.block_until_ready(gan_discriminator_forward(x, convs, fc_w, fc_b))
    ref = jax.block_until_ready(ref_forward(x, convs, fc_w, fc_b))

    assert out.shape == (N, 1), out.shape
    assert jnp.allclose(out, ref, atol=1e-2, rtol=1e-2), (out, ref)

    print("KERNEL_OK")
</pallas_src>

<mosaic_0001>
module attributes {stable_mosaic.version = 11 : i64} {
  func.func @_conv_bn_lrelu_kernel(%arg0: i32, %arg1: i32, %arg2: memref<8x64xbf16, #tpu.memory_space<vmem>>, %arg3: memref<64x256xbf16, #tpu.memory_space<vmem>>, %arg4: memref<8x1xf32, #tpu.memory_space<vmem>>, %arg5: memref<8x1xf32, #tpu.memory_space<vmem>>, %arg6: memref<8x256xf32, #tpu.memory_space<vmem>>, %arg7: memref<8x1xf32, #tpu.memory_space<vmem>>, %arg8: memref<8x1xf32, #tpu.memory_space<vmem>>) attributes {dimension_semantics = [#tpu.dimension_semantics<arbitrary>, #tpu.dimension_semantics<arbitrary>], iteration_bounds = array<i64: 2, 8>, scalar_prefetch = 0 : i64, scratch_operands = 2 : i64, tpu.core_type = #tpu.core_type<tc>, window_params = [{pipeline_mode = #tpu.pipeline_mode<synchronous>, transform_indices = @transform_0, window_bounds = array<i64: 8, 64>}, {transform_indices = @transform_1, window_bounds = array<i64: 64, 256>}, {pipeline_mode = #tpu.pipeline_mode<synchronous>, transform_indices = @transform_2, window_bounds = array<i64: 8, 1>}, {pipeline_mode = #tpu.pipeline_mode<synchronous>, transform_indices = @transform_3, window_bounds = array<i64: 8, 1>}, {transform_indices = @transform_4, window_bounds = array<i64: 8, 256>}]} {
    %c0 = arith.constant 0 : index
    %c0_0 = arith.constant 0 : index
    %0 = vector.load %arg2[%c0, %c0_0] : memref<8x64xbf16, #tpu.memory_space<vmem>>, vector<8x64xbf16>
    %c0_1 = arith.constant 0 : index
    %c0_2 = arith.constant 0 : index
    %1 = vector.load %arg3[%c0_1, %c0_2] : memref<64x256xbf16, #tpu.memory_space<vmem>>, vector<64x256xbf16>
    %cst = arith.constant dense<0.000000e+00> : vector<8x256xf32>
    %2 = tpu.matmul %0, %1, %cst {dimension_numbers = #tpu.dot_dimension_numbers<[1], [0], [0], [1], [0, 0, 1, 1], [], []>} : vector<8x64xbf16>, vector<64x256xbf16>, vector<8x256xf32> -> vector<8x256xf32>
    %cst_3 = arith.constant 2.000000e-01 : f32
    %3 = vector.broadcast %cst_3 : f32 to vector<8x256xf32>
    %4 = arith.mulf %3, %2 : vector<8x256xf32>
    %5 = arith.maximumf %2, %4 : vector<8x256xf32>
    %c0_i32 = arith.constant 0 : i32
    %6 = arith.cmpi eq, %arg0, %c0_i32 : i32
    %c0_i32_4 = arith.constant 0 : i32
    %7 = arith.cmpi eq, %arg1, %c0_i32_4 : i32
    %8 = arith.andi %6, %7 : i1
    %9 = arith.extui %8 : i1 to i32
    %c0_i32_5 = arith.constant 0 : i32
    %10 = arith.cmpi ne, %9, %c0_i32_5 : i32
    scf.if %10 {
      %cst_9 = arith.constant 0.000000e+00 : f32
      %17 = vector.broadcast %cst_9 : f32 to vector<8x1xf32>
      %c0_10 = arith.constant 0 : index
      %c0_11 = arith.constant 0 : index
      %18 = vector.load %arg7[%c0_10, %c0_11] : memref<8x1xf32, #tpu.memory_space<vmem>>, vector<8x1xf32>
      tpu.vector_store %arg7[%c0_10, %c0_11], %17 {strides = array<i32>} : memref<8x1xf32, #tpu.memory_space<vmem>>, vector<8x1xf32>,
      %cst_12 = arith.constant 0.000000e+00 : f32
      %19 = vector.broadcast %cst_12 : f32 to vector<8x1xf32>
      %c0_13 = arith.constant 0 : index
      %c0_14 = arith.constant 0 : index
      %20 = vector.load %arg8[%c0_13, %c0_14] : memref<8x1xf32, #tpu.memory_space<vmem>>, vector<8x1xf32>
      tpu.vector_store %arg8[%c0_13, %c0_14], %19 {strides = array<i32>} : memref<8x1xf32, #tpu.memory_space<vmem>>, vector<8x1xf32>,
    } else {
    }
    %c0_i32_6 = arith.constant 0 : i32
    %11 = arith.cmpi eq, %arg0, %c0_i32_6 : i32
    %12 = arith.extui %11 : i1 to i32
    %c0_i32_7 = arith.constant 0 : i32
    %13 = arith.cmpi ne, %12, %c0_i32_7 : i32
    scf.if %13 {
      %c0_9 = arith.constant 0 : index
      %c0_10 = arith.constant 0 : index
      %17 = vector.load %arg7[%c0_9, %c0_10] : memref<8x1xf32, #tpu.memory_space<vmem>>, vector<8x1xf32>
      %cst_11 = arith.constant dense<0.000000e+00> : vector<8xf32>
      %18 = vector.multi_reduction <add>, %5, %cst_11 [1] : vector<8x256xf32> to vector<8xf32>
      %19 = vector.shape_cast %18 : vector<8xf32> to vector<8x1xf32>
      %20 = arith.addf %17, %19 : vector<8x1xf32>
      %c0_12 = arith.constant 0 : index
      %c0_13 = arith.constant 0 : index
      %21 = vector.load %arg7[%c0_12, %c0_13] : memref<8x1xf32, #tpu.memory_space<vmem>>, vector<8x1xf32>
      tpu.vector_store %arg7[%c0_12, %c0_13], %20 {strides = array<i32>} : memref<8x1xf32, #tpu.memory_space<vmem>>, vector<8x1xf32>,
      %c0_14 = arith.constant 0 : index
      %c0_15 = arith.constant 0 : index
      %22 = vector.load %arg8[%c0_14, %c0_15] : memref<8x1xf32, #tpu.memory_space<vmem>>, vector<8x1xf32>
      %23 = arith.mulf %5, %5 : vector<8x256xf32>
      %cst_16 = arith.constant dense<0.000000e+00> : vector<8xf32>
      %24 = vector.multi_reduction <add>, %23, %cst_16 [1] : vector<8x256xf32> to vector<8xf32>
      %25 = vector.shape_cast %24 : vector<8xf32> to vector<8x1xf32>
      %26 = arith.addf %22, %25 : vector<8x1xf32>
      %c0_17 = arith.constant 0 : index
      %c0_18 = arith.constant 0 : index
      %27 = vector.load %arg8[%c0_17, %c0_18] : memref<8x1xf32, #tpu.memory_space<vmem>>, vector<8x1xf32>
      tpu.vector_store %arg8[%c0_17, %c0_18], %26 {strides = array<i32>} : memref<8x1xf32, #tpu.memory_space<vmem>>, vector<8x1xf32>,
      %c0_19 = arith.constant 0 : index
      %c0_20 = arith.constant 0 : index
      %28 = vector.load %arg6[%c0_19, %c0_20] : memref<8x256xf32, #tpu.memory_space<vmem>>, vector<8x256xf32>
      tpu.vector_store %arg6[%c0_19, %c0_20], %5 {strides = array<i32>} : memref<8x256xf32, #tpu.memory_space<vmem>>, vector<8x256xf32>,
    } else {
    }
    %c1_i32 = arith.constant 1 : i32
    %14 = arith.cmpi eq, %arg0, %c1_i32 : i32
    %15 = arith.extui %14 : i1 to i32
    %c0_i32_8 = arith.constant 0 : i32
    %16 = arith.cmpi ne, %15, %c0_i32_8 : i32
    scf.if %16 {
      %c0_9 = arith.constant 0 : index
      %c0_10 = arith.constant 0 : index
      %17 = vector.load %arg7[%c0_9, %c0_10] : memref<8x1xf32, #tpu.memory_space<vmem>>, vector<8x1xf32>
      %cst_11 = arith.constant 4.8828125E-4 : f32
      %18 = vector.broadcast %cst_11 : f32 to vector<8x1xf32>
      %19 = arith.mulf %17, %18 : vector<8x1xf32>
      %c0_12 = arith.constant 0 : index
      %c0_13 = arith.constant 0 : index
      %20 = vector.load %arg8[%c0_12, %c0_13] : memref<8x1xf32, #tpu.memory_space<vmem>>, vector<8x1xf32>
      %cst_14 = arith.constant 4.8828125E-4 : f32
      %21 = vector.broadcast %cst_14 : f32 to vector<8x1xf32>
      %22 = arith.mulf %20, %21 : vector<8x1xf32>
      %23 = arith.mulf %19, %19 : vector<8x1xf32>
      %24 = arith.subf %22, %23 : vector<8x1xf32>
      %c0_15 = arith.constant 0 : index
      %c0_16 = arith.constant 0 : index
      %25 = vector.load %arg4[%c0_15, %c0_16] : memref<8x1xf32, #tpu.memory_space<vmem>>, vector<8x1xf32>
      %cst_17 = arith.constant 9.99999974E-6 : f32
      %26 = vector.broadcast %cst_17 : f32 to vector<8x1xf32>
      %27 = arith.addf %24, %26 : vector<8x1xf32>
      %28 = math.rsqrt %27 : vector<8x1xf32>
      %29 = arith.mulf %25, %28 : vector<8x1xf32>
      %c0_18 = arith.constant 0 : index
      %c0_19 = arith.constant 0 : index
      %30 = vector.load %arg5[%c0_18, %c0_19] : memref<8x1xf32, #tpu.memory_space<vmem>>, vector<8x1xf32>
      %31 = arith.mulf %19, %29 : vector<8x1xf32>
      %32 = arith.subf %30, %31 : vector<8x1xf32>
      %33 = vector.broadcast %29 : vector<8x1xf32> to vector<8x256xf32>
      %34 = arith.mulf %5, %33 : vector<8x256xf32>
      %35 = vector.broadcast %32 : vector<8x1xf32> to vector<8x256xf32>
      %36 = arith.addf %34, %35 : vector<8x256xf32>
      %c0_20 = arith.constant 0 : index
      %c0_21 = arith.constant 0 : index
      %37 = vector.load %arg6[%c0_20, %c0_21] : memref<8x256xf32, #tpu.memory_space<vmem>>, vector<8x256xf32>
      tpu.vector_store %arg6[%c0_20, %c0_21], %36 {strides = array<i32>} : memref<8x256xf32, #tpu.memory_space<vmem>>, vector<8x256xf32>,
    } else {
    }
    return
  }
  func.func @transform_0(%arg0: i32, %arg1: i32) -> (i32, i32) {
    %c0_i32 = arith.constant 0 : i32
    %c0_i32_0 = arith.constant 0 : i32
    %c0_i32_1 = arith.constant 0 : i32
    return %c0_i32, %c0_i32_0 : i32, i32
  }
  func.func @transform_1(%arg0: i32, %arg1: i32) -> (i32, i32) {
    %c0_i32 = arith.constant 0 : i32
    %c0_i32_0 = arith.constant 0 : i32
    return %c0_i32, %arg1 : i32, i32
  }
  func.func @transform_2(%arg0: i32, %arg1: i32) -> (i32, i32) {
    %c0_i32 = arith.constant 0 : i32
    %c0_i32_0 = arith.constant 0 : i32
    %c0_i32_1 = arith.constant 0 : i32
    return %c0_i32, %c0_i32_0 : i32, i32
  }
  func.func @transform_3(%arg0: i32, %arg1: i32) -> (i32, i32) {
    %c0_i32 = arith.constant 0 : i32
    %c0_i32_0 = arith.constant 0 : i32
    %c0_i32_1 = arith.constant 0 : i32
    return %c0_i32, %c0_i32_0 : i32, i32
  }
  func.func @transform_4(%arg0: i32, %arg1: i32) -> (i32, i32) {
    %c0_i32 = arith.constant 0 : i32
    %c0_i32_0 = arith.constant 0 : i32
    return %c0_i32, %arg1 : i32, i32
  }
}

</mosaic_0001>

<llo_original>
// kernel: tpu_custom_call.1
$region0: #{tpu_custom_call.1}
  #allocation0 [shape = 'u32[]', space=smem, size = 0x4, offset = 0x4, fixed_abs, tag = 'smem constant byte address 0x4 - core index']
  #allocation1 [shape = 'u32[72,128]{1,0:T(1,128)}', space=vmem, size = 0x9000, scoped, tag = 'internal scratch']
  #allocation2 [shape = 'f32[8,1]{1,0:T(8,128)}', space=vmem, size = 0x1000, scoped, tag = 'scratch operand']
  #allocation3 [shape = 'f32[8,1]{1,0:T(8,128)}', space=vmem, size = 0x1000, scoped, tag = 'scratch operand']
  %s0 = inlined_call_operand.vmem [shape: bf16[8,64], index: 0, kind: input, shape index: {}]
  %s1 = inlined_call_operand.hbm [shape: bf16[64,2048], index: 1, kind: input, shape index: {}]
  %s2 = inlined_call_operand.vmem [shape: f32[8,1], index: 2, kind: input, shape index: {}]
  %s3 = inlined_call_operand.vmem [shape: f32[8,1], index: 3, kind: input, shape index: {}]
  %s4 = inlined_call_operand.hbm [shape: f32[8,2048], index: 4, kind: output, shape index: {}]
  %s5 = sld [smem:[#allocation0]]
  $region65: #{tpu_custom_call.1} parent=0
    _
  %s7 = ssub.s32 1, %s5
  %s8 = scalar_select 0, %s7, %s5
  $region1: #{tpu_custom_call.1} parent=0
    #allocation4 [shape = 'u8[65536]{0}', space=vmem, size = 0x10000, scoped, tag = 'input window, operand 1']
    #allocation5 [shape = 's32[2]{0}', space=sflag, size = 0x8, scoped, tag = 'scoped memory for tpu_custom_call.1']
    #allocation6 [shape = 's32[2]{0}', space=sflag, size = 0x8, scoped, tag = 'scoped memory for tpu_custom_call.1']
    #allocation7 [shape = 'u8[16384]{0}', space=vmem, size = 0x4000, scoped, tag = 'output window, operand 0']
    %9 = vsyncpa [#allocation5], 0
    %s10 = scalar_lea.sflag [#allocation5], 1
    %11 = vsyncpa %s10, 0
    %12 = vsyncpa [#allocation6], 0
    %s13 = scalar_lea.sflag [#allocation6], 1
    %14 = vsyncpa %s13, 0
    loop: start=0, step=1, limit=18
    $region2: #{tpu_custom_call.1} parent=1 // loop_pre_header
      _
    $region3: #{tpu_custom_call.1} parent=1 // loop_header
      %s16 = sphi 0, %s20
      %p17 = scmp.ge.s32.totalorder %s16, 18
      %s23 = sphi 0, %s35
      %s24 = sphi 0, %s31
      %s25 = sphi 0, %s23
      %s26 = sphi 0, %s24
      %s27 = sphi 0, %s25
      %s28 = sphi 0, %s26
      %s36 = sphi 0, %s36
      %s38 = sphi 0, %s36
      %s39 = sphi 0, %s38
      %s53 = sphi 0, %s39
      %s59 = sphi 0, %s61
      %s62 = sphi 0, %s59
      %s63 = sphi 0, %s62
      %s79 = sphi 0, %s63
      %s83 = sphi 0, %s83
      %s85 = sphi 0, %s83
      %s86 = sphi 0, %s85
      %s100 = sphi 0, %s86
      %s104 = sphi 0, %s104
      %s106 = sphi 0, %s104
      %s107 = sphi 0, %s106
      %s121 = sphi 0, %s107
      %s127 = sphi 0, %s129
      %s130 = sphi 0, %s127
      %s131 = sphi 0, %s130
      %s147 = sphi 0, %s131
    $region4: #{tpu_custom_call.1} parent=1 // loop_header_branch
      %19 = sbr.rel (%p17) target = $region8
    $region5: #{tpu_custom_call.1} parent=1 // loop_body
      %s21 = ssub.s32 %s16, 1
      %s22 = ssub.s32 %s16, 2
      %s29 = sadd.s32 1, %s24
      %p30 = scmp.ge.s32.totalorder %s29, 8
      %s31 = scalar_select %p30, 0, %s29
      %s32 = sadd.s32 1, %s23
      %s33 = scalar_select %p30, %s32, %s23
      %p34 = scmp.ge.s32.totalorder %s33, 2
      %s35 = scalar_select %p34, 0, %s33
      %s37 = sadd.s32 %s36, 1
      %p40 = scmp.eq.s32.totalorder %s16, 15
      %p41 = scmp.ne.s32.totalorder %s36, %s38
      %p42 = scmp.eq.s32.totalorder %s16, 0
      %p43 = por %p41, %p42
      %p44 = scmp.ne.s32.totalorder %s36, %s38
      %p45 = scmp.eq.s32.totalorder %s21, 15
      %p46 = por %p44, %p45
      %p47 = scmp.ne.s32.totalorder %s38, %s39
      %p48 = scmp.eq.s32.totalorder %s21, 0
      %p49 = por %p47, %p48
      %p50 = scmp.ne.s32.totalorder %s38, %s39
      %p51 = scmp.eq.s32.totalorder %s22, 15
      %p52 = por %p50, %p51
      %p54 = scmp.ne.s32.totalorder %s39, %s53
      %p55 = scmp.eq.s32.totalorder %s22, 0
      %p56 = por %p54, %p55
      %s57 = ssub.s32 %s24, %s31
      %p58 = scmp.eq.s32.totalorder %s57, 0
      %s60 = sadd.s32 %s59, 1
      %s61 = scalar_select %p58, %s59, %s60
      %p64 = pneg %p58
      %p65 = scmp.eq.s32.totalorder %s16, 15
      %p66 = por %p64, %p65
      %p67 = scmp.ne.s32.totalorder %s59, %s62
      %p68 = scmp.eq.s32.totalorder %s16, 0
      %p69 = por %p67, %p68
      %p70 = scmp.ne.s32.totalorder %s59, %s62
      %p71 = scmp.eq.s32.totalorder %s21, 15
      %p72 = por %p70, %p71
      %p73 = scmp.ne.s32.totalorder %s62, %s63
      %p74 = scmp.eq.s32.totalorder %s21, 0
      %p75 = por %p73, %p74
      %p76 = scmp.ne.s32.totalorder %s62, %s63
      %p77 = scmp.eq.s32.totalorder %s22, 15
      %p78 = por %p76, %p77
      %p80 = scmp.ne.s32.totalorder %s63, %s79
      %p81 = scmp.eq.s32.totalorder %s22, 0
      %p82 = por %p80, %p81
      %s84 = sadd.s32 %s83, 1
      %p87 = scmp.eq.s32.totalorder %s16, 15
      %p88 = scmp.ne.s32.totalorder %s83, %s85
      %p89 = scmp.eq.s32.totalorder %s16, 0
      %p90 = por %p88, %p89
      %p91 = scmp.ne.s32.totalorder %s83, %s85
      %p92 = scmp.eq.s32.totalorder %s21, 15
      %p93 = por %p91, %p92
      %p94 = scmp.ne.s32.totalorder %s85, %s86
      %p95 = scmp.eq.s32.totalorder %s21, 0
      %p96 = por %p94, %p95
      %p97 = scmp.ne.s32.totalorder %s85, %s86
      %p98 = scmp.eq.s32.totalorder %s22, 15
      %p99 = por %p97, %p98
      %p101 = scmp.ne.s32.totalorder %s86, %s100
      %p102 = scmp.eq.s32.totalorder %s22, 0
      %p103 = por %p101, %p102
      %s105 = sadd.s32 %s104, 1
      %p108 = scmp.eq.s32.totalorder %s16, 15
      %p109 = scmp.ne.s32.totalorder %s104, %s106
      %p110 = scmp.eq.s32.totalorder %s16, 0
      %p111 = por %p109, %p110
      %p112 = scmp.ne.s32.totalorder %s104, %s106
      %p113 = scmp.eq.s32.totalorder %s21, 15
      %p114 = por %p112, %p113
      %p115 = scmp.ne.s32.totalorder %s106, %s107
      %p116 = scmp.eq.s32.totalorder %s21, 0
      %p117 = por %p115, %p116
      %p118 = scmp.ne.s32.totalorder %s106, %s107
      %p119 = scmp.eq.s32.totalorder %s22, 15
      %p120 = por %p118, %p119
      %p122 = scmp.ne.s32.totalorder %s107, %s121
      %p123 = scmp.eq.s32.totalorder %s22, 0
      %p124 = por %p122, %p123
      %s125 = ssub.s32 %s24, %s31
      %p126 = scmp.eq.s32.totalorder %s125, 0
      %s128 = sadd.s32 %s127, 1
      %s129 = scalar_select %p126, %s127, %s128
      %p132 = pneg %p126
      %p133 = scmp.eq.s32.totalorder %s16, 15
      %p134 = por %p132, %p133
      %p135 = scmp.ne.s32.totalorder %s127, %s130
      %p136 = scmp.eq.s32.totalorder %s16, 0
      %p137 = por %p135, %p136
      %p138 = scmp.ne.s32.totalorder %s127, %s130
      %p139 = scmp.eq.s32.totalorder %s21, 15
      %p140 = por %p138, %p139
      %p141 = scmp.ne.s32.totalorder %s130, %s131
      %p142 = scmp.eq.s32.totalorder %s21, 0
      %p143 = por %p141, %p142
      %p144 = scmp.ne.s32.totalorder %s130, %s131
      %p145 = scmp.eq.s32.totalorder %s22, 15
      %p146 = por %p144, %p145
      %p148 = scmp.ne.s32.totalorder %s131, %s147
      %p149 = scmp.eq.s32.totalorder %s22, 0
      %p150 = por %p148, %p149
      %p151 = scmp.le.s32.totalorder 1, %s16
      %p152 = scmp.lt.s32.totalorder %s16, 17
      %p153 = pnand %p151, %p152
      %p154 = pneg %p153
      // Predicated region
      $region9: #{tpu_custom_call.1} parent=5 // pred_check
        _
      $region10: #{tpu_custom_call.1} parent=5 // pred_check_branch
        %156 = sbr.rel (%p153) target = $region12
      $region11: #{tpu_custom_call.1} parent=5 // pred_region
        %s157 = ssub.s32 %s16, 1
        // Predicated region
        $region13: #{tpu_custom_call.1} parent=11 // pred_check
          %p158 = pneg %p49
        $region14: #{tpu_custom_call.1} parent=11 // pred_check_branch
          %160 = sbr.rel (%p158) target = $region16
        $region15: #{tpu_custom_call.1} parent=11 // pred_region
          _
        $region16: #{tpu_custom_call.1} parent=11 // pred_fallthru
          _
        // Predicated region
        $region17: #{tpu_custom_call.1} parent=11 // pred_check
          %p161 = pneg %p96
        $region18: #{tpu_custom_call.1} parent=11 // pred_check_branch
          %163 = sbr.rel (%p161) target = $region20
        $region19: #{tpu_custom_call.1} parent=11 // pred_region
          _
        $region20: #{tpu_custom_call.1} parent=11 // pred_fallthru
          _
        // Predicated region
        $region21: #{tpu_custom_call.1} parent=11 // pred_check
          %p164 = pneg %p117
        $region22: #{tpu_custom_call.1} parent=11 // pred_check_branch
          %166 = sbr.rel (%p164) target = $region24
        $region23: #{tpu_custom_call.1} parent=11 // pred_region
          _
        $region24: #{tpu_custom_call.1} parent=11 // pred_fallthru
          _
      $region12: #{tpu_custom_call.1} parent=5 // pred_fallthru
        _
      %p167 = scmp.lt.s32.totalorder %s16, 16
      // Predicated region
      $region25: #{tpu_custom_call.1} parent=5 // pred_check
        %p168 = pneg %p167
      $region26: #{tpu_custom_call.1} parent=5 // pred_check_branch
        %170 = sbr.rel (%p168) target = $region28
      $region27: #{tpu_custom_call.1} parent=5 // pred_region
        // Predicated region
        $region29: #{tpu_custom_call.1} parent=27 // pred_check
          %p171 = pneg %p69
        $region30: #{tpu_custom_call.1} parent=27 // pred_check_branch
          %173 = sbr.rel (%p171) target = $region32
        $region31: #{tpu_custom_call.1} parent=27 // pred_region
          %s174 = sand.u32 %s59, 1
          %s175 = scalar_lea.sflag [#allocation5], %s174
          %s176 = sand.u32 %s59, 1
          %s177 = smul.addr %s176, 64
          %s178 = scalar_lea.vmem [#allocation4], %s177
          %s179 = smul.u32 2, %s24
          %181 = vsyncadd %s175, 0
          %s182 = smul.addr %s179, 4
          %s183 = scalar_lea.hbm %s1, %s182
          %s184 = sshll.u32 %s183, 4
          %s185 = int_to_ptr.hbm [resolvable:$true] %s184
          %s186 = sshll.u32 %s178, 4
          %s187 = int_to_ptr.vmem [resolvable:$true] %s186
          %192 = dma.hbm_to_vmem [thread:$0]  %s185, 1024, %s187, %s175, 1024, 128, 8
        $region32: #{tpu_custom_call.1} parent=27 // pred_fallthru
          _
      $region28: #{tpu_custom_call.1} parent=5 // pred_fallthru
        _
      %p193 = scmp.le.s32.totalorder 1, %s16
      %p194 = scmp.lt.s32.totalorder %s16, 17
      %p195 = pnand %p193, %p194
      %p196 = pneg %p195
      // Predicated region
      $region33: #{tpu_custom_call.1} parent=5 // pred_check
        _
      $region34: #{tpu_custom_call.1} parent=5 // pred_check_branch
        %198 = sbr.rel (%p195) target = $region36
      $region35: #{tpu_custom_call.1} parent=5 // pred_region
        %s199 = ssub.s32 %s16, 1
        %s200 = sand.u32 %s62, 1
        %s201 = scalar_lea.sflag [#allocation5], %s200
        %s202 = sand.u32 %s62, 1
        %s203 = smul.addr %s202, 64
        %s204 = scalar_lea.vmem [#allocation4], %s203
        // Predicated region
        $region37: #{tpu_custom_call.1} parent=35 // pred_check
          %p205 = pneg %p75
        $region38: #{tpu_custom_call.1} parent=35 // pred_check_branch
          %207 = sbr.rel (%p205) target = $region40
        $region39: #{tpu_custom_call.1} parent=35 // pred_region
          %209 = dma.done %s201, 1024
        $region40: #{tpu_custom_call.1} parent=35 // pred_fallthru
          _
        %p210 = pneg %p49
        %p211 = pneg %p46
        %s212 = sand.u32 %s62, 1
        %s213 = scalar_lea.sflag [#allocation5], %s212
        %s214 = sand.u32 %s62, 1
        %s215 = smul.addr %s214, 64
        %s216 = scalar_lea.vmem [#allocation4], %s215
        %p217 = pneg %p75
        %p218 = pneg %p72
        %p219 = pneg %p96
        %p220 = pneg %p93
        %p221 = pneg %p117
        %p222 = pneg %p114
        %p223 = pneg %p143
        %p224 = pneg %p140
        %s225 = sand.u32 %s130, 1
        %s226 = scalar_lea.sflag [#allocation6], %s225
        %s227 = sand.u32 %s130, 1
        %s228 = smul.addr %s227, 16
        %s229 = scalar_lea.vmem [#allocation7], %s228
        %s230 = smul.u32 2, %s26
        %s231 = smul.u32 2, %s26
        %v233 = vld [vmem:[%s0] sm:$0xf]
        %v234 = vld [vmem:[%s204] sm:$0xff]
        %v235 = vld [vmem:[%s204 + $0x8] sm:$0xff]
        %v236 = vld [vmem:[%s204 + $0x10] sm:$0xff]
        %v237 = vld [vmem:[%s204 + $0x18] sm:$0xff]
        %v238 = vld [vmem:[%s204 + $0x20] sm:$0xff]
        %v239 = vld [vmem:[%s204 + $0x28] sm:$0xff]
        %v240 = vld [vmem:[%s204 + $0x30] sm:$0xff]
        %v241 = vld [vmem:[%s204 + $0x38] sm:$0xff]
        %v250 = vunpack.c.l.b16 %v234
        %v251 = vunpack.c.h.b16 %v234
        %v252 = vunpack.c.l.b16 %v235
        %v253 = vunpack.c.h.b16 %v235
        %v254 = vunpack.c.l.b16 %v236
        %v255 = vunpack.c.h.b16 %v236
        %v256 = vunpack.c.l.b16 %v237
        %v257 = vunpack.c.h.b16 %v237
        %v258 = vunpack.c.l.b16 %v238
        %v259 = vunpack.c.h.b16 %v238
        %v260 = vunpack.c.l.b16 %v239
        %v261 = vunpack.c.h.b16 %v239
        %v262 = vunpack.c.l.b16 %v240
        %v263 = vunpack.c.h.b16 %v240
        %v264 = vunpack.c.l.b16 %v241
        %v265 = vunpack.c.h.b16 %v241
        %v266 = vpack.c.b16 %v252, %v250
        %v267 = vpack.c.b16 %v253, %v251
        %v268 = vpack.c.b16 %v256, %v254
        %v269 = vpack.c.b16 %v257, %v255
        %v270 = vpack.c.b16 %v260, %v258
        %v271 = vpack.c.b16 %v261, %v259
        %v272 = vpack.c.b16 %v264, %v262
        %v273 = vpack.c.b16 %v265, %v263
        %vm282 = vcmask 523264
        %v284 = vsel %vm282, %v233, 0
        %286 = vmatpush.bf16.msra.mxu0 0
        %287 = vmatpush.bf16.msra.mxu0 0
        %288 = vmatpush.bf16.msra.mxu0 0
        %289 = vmatpush.bf16.msra.mxu0 0
        %290 = vmatpush.bf16.msra.mxu0 %v272
        %291 = vmatpush.bf16.msra.mxu0 %v270
        %292 = vmatpush.bf16.msra.mxu0 %v268
        %293 = vmatpush.bf16.msra.mxu0 %v266
        %294 = vmatmul.bf16.gmra.mxu0 %v284
        %v295 = vpop.f32.mrf.mxu0
        %v296 = vadd.f32 0.0, %v295
        %v297 = vpop.f32.mrf.mxu0
        %298 = vdwg.mxu0
        %299 = vmatpush.bf16.msra.mxu0 0
        %300 = vmatpush.bf16.msra.mxu0 0
        %301 = vmatpush.bf16.msra.mxu0 0
        %302 = vmatpush.bf16.msra.mxu0 0
        %303 = vmatpush.bf16.msra.mxu0 %v273
        %304 = vmatpush.bf16.msra.mxu0 %v271
        %305 = vmatpush.bf16.msra.mxu0 %v269
        %306 = vmatpush.bf16.msra.mxu0 %v267
        %307 = vmatmul.bf16.gmra.mxu0 %v284
        %v308 = vpop.f32.mrf.mxu0
        %v309 = vadd.f32 0.0, %v308
        %v310 = vpop.f32.mrf.mxu0
        %311 = vdwg.mxu0
        %v312 = vmul.f32 %v296, 0.2
        %v313 = vmul.f32 %v309, 0.2
        %v314 = vmax.f32 %v296, %v312
        %v315 = vmax.f32 %v309, %v313
        %p316 = scmp.eq.s32.totalorder %s25, 0
        %p317 = scmp.eq.s32.totalorder %s26, 0
        %p318 = pnand %p316, %p317
        %p319 = pneg %p318
        // Predicated region
        $region41: #{tpu_custom_call.1} parent=35 // pred_check
          _
        $region42: #{tpu_custom_call.1} parent=35 // pred_check_branch
          %321 = sbr.rel (%p318) target = $region44
        $region43: #{tpu_custom_call.1} parent=35 // pred_region
          %vm322 = vcmask 7168
          %323 = vst.msk [vmem:[#allocation2] sm:$0xff] %vm322, 0.0
          %324 = vst.msk [vmem:[#allocation3] sm:$0xff] %vm322, 0.0
        $region44: #{tpu_custom_call.1} parent=35 // pred_fallthru
          _
        // Predicated region
        $region45: #{tpu_custom_call.1} parent=35 // pred_check
          %p325 = pneg %p316
        $region46: #{tpu_custom_call.1} parent=35 // pred_check_branch
          %327 = sbr.rel (%p325) target = $region48
        $region47: #{tpu_custom_call.1} parent=35 // pred_region
          %v328 = vld [vmem:[#allocation2] sm:$0xff]
          %v329 = vadd.f32 %v314, %v315
          %330 = vadd.xlane.f32.xlu0 %v329
          %v331 = vpop.xlane.xlu0 %330
          %v332 = vadd.f32 %v328, %v331
          %vm333 = vcmask 7168
          %334 = vst.msk [vmem:[#allocation2] sm:$0xff] %vm333, %v332
          %v335 = vld [vmem:[#allocation3] sm:$0xff]
          %v336 = vmul.f32 %v314, %v314
          %v337 = vmul.f32 %v315, %v315
          %v338 = vadd.f32 %v336, %v337
          %339 = vadd.xlane.f32.xlu0 %v338
          %v340 = vpop.xlane.xlu0 %339
          %v341 = vadd.f32 %v335, %v340
          %342 = vst.msk [vmem:[#allocation3] sm:$0xff] %vm333, %v341
          %343 = vst [vmem:[%s229] sm:$0xff] %v314
          %344 = vst [vmem:[%s229 + $0x8] sm:$0xff] %v315
        $region48: #{tpu_custom_call.1} parent=35 // pred_fallthru
          _
        %p345 = scmp.eq.s32.totalorder %s25, 1
        // Predicated region
        $region49: #{tpu_custom_call.1} parent=35 // pred_check
          %p346 = pneg %p345
        $region50: #{tpu_custom_call.1} parent=35 // pred_check_branch
          %348 = sbr.rel (%p346) target = $region52
        $region51: #{tpu_custom_call.1} parent=35 // pred_region
          %v349 = vld [vmem:[#allocation2] sm:$0xff]
          %v350 = vmul.f32 %v349, 0.00048828125
          %v351 = vld [vmem:[#allocation3] sm:$0xff]
          %v352 = vmul.f32 %v351, 0.00048828125
          %v353 = vmul.f32 %v350, %v350
          %v354 = vsub.f32 %v352, %v353
          %v355 = vld [vmem:[%s2] sm:$0xff]
          %v356 = vadd.f32 %v354, 1e-05
          %v357 = vrsqrt.pop %v356
          %v358 = vmul.f32 %v357, %v356
          %v359 = vmul.f32 %v358, %v357
          %v360 = vmul.f32 0.5, %v359
          %v361 = vsub.f32 1.5, %v360
          %v362 = vmul.f32 %v357, %v361
          %vm363 = vweird.f32 %v356
          %vm364 = vweird.f32 %v357
          %vm365 = vmor %vm363, %vm364
          %v366 = vsel %vm365, %v357, %v362
          %v367 = vmul.f32 %v355, %v366
          %v368 = vld [vmem:[%s3] sm:$0xff]
          %v369 = vmul.f32 %v350, %v367
          %v370 = vsub.f32 %v368, %v369
          %372 = vset.pattern.permute.xlu0 0
          %373 = vperm.xlu0 %372, %v367
          %v374 = vpop.permute.xlu0 %373
          %v376 = vmul.f32 %v314, %v374
          %v377 = vmul.f32 %v315, %v374
          %379 = vset.pattern.permute.xlu0 0
          %380 = vperm.xlu0 %379, %v370
          %v381 = vpop.permute.xlu0 %380
          %v383 = vadd.f32 %v376, %v381
          %v384 = vadd.f32 %v377, %v381
          %385 = vst [vmem:[%s229] sm:$0xff] %v383
          %386 = vst [vmem:[%s229 + $0x8] sm:$0xff] %v384
        $region52: #{tpu_custom_call.1} parent=35 // pred_fallthru
          _
        %s387 = sand.u32 %s130, 1
        %s388 = scalar_lea.sflag [#allocation6], %s387
        %s389 = sand.u32 %s130, 1
        %s390 = smul.addr %s389, 16
        %s391 = scalar_lea.vmem [#allocation7], %s390
        // Predicated region
        $region53: #{tpu_custom_call.1} parent=35 // pred_check
          %p392 = pneg %p140
        $region54: #{tpu_custom_call.1} parent=35 // pred_check_branch
          %394 = sbr.rel (%p392) target = $region56
        $region55: #{tpu_custom_call.1} parent=35 // pred_region
          %s395 = smul.u32 2, %s26
          %397 = vsyncadd %s388, 0
          %s398 = smul.addr %s395, 8
          %s399 = scalar_lea.hbm %s4, %s398
          %s401 = sshll.u32 %s391, 4
          %s402 = int_to_ptr.vmem [resolvable:$true] %s401
          %s403 = sshll.u32 %s399, 4
          %s404 = int_to_ptr.hbm [resolvable:$true] %s403
          %406 = dma.vmem_to_hbm [thread:$0]  %s402, 256, %s404, %s388
        $region56: #{tpu_custom_call.1} parent=35 // pred_fallthru
          _
      $region36: #{tpu_custom_call.1} parent=5 // pred_fallthru
        _
      %p407 = scmp.le.s32.totalorder 2, %s16
      // Predicated region
      $region57: #{tpu_custom_call.1} parent=5 // pred_check
        %p408 = pneg %p407
      $region58: #{tpu_custom_call.1} parent=5 // pred_check_branch
        %410 = sbr.rel (%p408) target = $region60
      $region59: #{tpu_custom_call.1} parent=5 // pred_region
        %s411 = ssub.s32 %s16, 2
        // Predicated region
        $region61: #{tpu_custom_call.1} parent=59 // pred_check
          %p412 = pneg %p146
        $region62: #{tpu_custom_call.1} parent=59 // pred_check_branch
          %414 = sbr.rel (%p412) target = $region64
        $region63: #{tpu_custom_call.1} parent=59 // pred_region
          %s415 = sand.u32 %s131, 1
          %s416 = scalar_lea.sflag [#allocation6], %s415
          %s417 = sand.u32 %s131, 1
          %s418 = smul.addr %s417, 16
          %s419 = scalar_lea.vmem [#allocation7], %s418
          %421 = dma.done %s416, 256
        $region64: #{tpu_custom_call.1} parent=59 // pred_fallthru
          _
      $region60: #{tpu_custom_call.1} parent=5 // pred_fallthru
        _
    $region6: #{tpu_custom_call.1} parent=1 // loop_footer
      %s20 = sadd.s32 1, %s16
    $region7: #{tpu_custom_call.1} parent=1 // loop_footer_branch
      %15 = sbr.rel target = $region3
    $region8: #{tpu_custom_call.1} parent=1 // loop_exit
      _
    %422 = vsyncpa [#allocation5], 1
    %s423 = scalar_lea.sflag [#allocation5], 1
    %424 = vsyncpa %s423, 1
    %425 = vsyncpa [#allocation6], 1
    %s426 = scalar_lea.sflag [#allocation6], 1
    %427 = vsyncpa %s426, 1

</llo_original>
